<compile_context>
chip_gen: v7x
topology: tpu7x:2x2x1
jax: 0.10.0
libtpu: 0.0.40
codegen_flags: <defaults>
</compile_context>

<pallas_src>
import functools

import jax
import jax.numpy as jnp
from jax import lax
from jax.experimental import pallas as pl
from jax.experimental.pallas import tpu as pltpu


def _basic_conv_kernel(x_ref, w_ref, mask_ref, scale_ref, bias_ref, o_ref, *,
                       K, W, pad, S, neg_slope):
    # x_ref:     (Cin, L)        bf16  flattened H-padded input (+pad halo each end)
    # w_ref:     (K*K, Cout, Cin) bf16 conv weights, one (Cout, Cin) matrix per tap
    # mask_ref:  (K, S)          bf16  per-kw validity mask (emulates W zero padding)
    # scale_ref: (Cout, 1)       f32   folded BN scale  = gamma / sqrt(var + eps)
    # bias_ref:  (Cout, 1)       f32   folded BN bias   = beta - mean * scale
    # o_ref:     (Cout, S)       f32   S = Ho*Wo, lane-dense output (NCHW flattened)
    Cout = o_ref.shape[0]
    acc = jnp.zeros((Cout, S), jnp.float32)
    for kh in range(K):                                   # static unrolled tap loops
        for kw in range(K):
            # lane-offset window of the flat input: x_pad[c, oh+kh, ow+kw-pad] for all (oh,ow)
            xs = x_ref[:, pl.ds(kh * W + kw, S)]          # (Cin, S), static slice (view-ish)
            if kw != pad:                                 # zero lanes whose true source is W-OOB
                xs = xs * mask_ref[kw:kw + 1, :]
            w_tap = w_ref[kh * K + kw]                    # (Cout, Cin)
            acc += jnp.dot(w_tap, xs, preferred_element_type=jnp.float32)
    y = acc * scale_ref[...] + bias_ref[...]              # BatchNorm (inference, folded), f32
    y = jnp.where(y > 0, y, neg_slope * y)                # LeakyReLU(0.1)
    o_ref[...] = y.astype(o_ref.dtype)                    # single unmasked lane-dense store


def basic_conv(x_nchw, w_oihw, gamma, beta, running_mean, running_var, *,
               stride=1, eps=1e-5, neg_slope=0.1):
    """Pallas implementation of BasicConv.forward. Input/output are NCHW (PyTorch convention)."""
    N, Cin, H, W = x_nchw.shape
    Cout, _, K, _ = w_oihw.shape
    if K % 2 != 1:
        # TODO(synk): even kernel_size (pad=K//2 is not a 'same' conv) is not supported by the
        # flat-window kernel; CSPdarknet53_tiny only instantiates odd kernel sizes.
        raise NotImplementedError("even kernel_size not supported")
    pad = K // 2
    S = H * W                         # stride-1 'same' output spatial size (lane dimension)
    Hp = H + 2 * pad
    L = Hp * W + 2 * pad              # flattened input length incl. corner-tap halo

    # ---- wrapper-side layout plumbing & parameter folding (no transposes, no W-pad pass) ----
    x = x_nchw.astype(jnp.bfloat16)
    x = jnp.pad(x, ((0, 0), (0, 0), (pad, pad), (0, 0)))       # zero-pad H only
    x = x.reshape(N, Cin, Hp * W)                              # free (row-major) flatten
    x_lin = jnp.pad(x, ((0, 0), (0, 0), (pad, pad)))           # halo so every tap window is in-bounds

    w2 = jnp.transpose(w_oihw, (2, 3, 0, 1)).reshape(K * K, Cout, Cin).astype(jnp.bfloat16)

    # W-direction zero padding emulated by a per-kw 0/1 lane mask over the flat output index.
    ow = jnp.arange(S, dtype=jnp.int32) % W
    col = ow[None, :] + jnp.arange(K, dtype=jnp.int32)[:, None] - pad
    wmask = ((col >= 0) & (col < W)).astype(jnp.bfloat16)      # (K, S)

    inv_std = lax.rsqrt(running_var.astype(jnp.float32) + eps)
    scale = (gamma.astype(jnp.float32) * inv_std).reshape(Cout, 1)
    bias = (beta.astype(jnp.float32)
            - running_mean.astype(jnp.float32) * scale[:, 0]).reshape(Cout, 1)

    kernel = functools.partial(_basic_conv_kernel, K=K, W=W, pad=pad, S=S,
                               neg_slope=neg_slope)

    flops = 2 * N * S * K * K * Cin * Cout + 4 * N * Cout * S
    bytes_accessed = (x_lin.size * 2 + w2.size * 2 + wmask.size * 2
                      + scale.size * 4 + bias.size * 4 + N * Cout * S * 4)

    out_flat = pl.pallas_call(
        kernel,
        out_shape=jax.ShapeDtypeStruct((N, Cout, S), jnp.float32),
        grid=(N,),
        in_specs=[
            pl.BlockSpec((None, Cin, L), lambda n: (n, 0, 0)),       # per-image flat input
            pl.BlockSpec((K * K, Cout, Cin), lambda n: (0, 0, 0)),   # all taps
            pl.BlockSpec((K, S), lambda n: (0, 0)),                  # per-kw lane masks
            pl.BlockSpec((Cout, 1), lambda n: (0, 0)),               # folded BN scale
            pl.BlockSpec((Cout, 1), lambda n: (0, 0)),               # folded BN bias
        ],
        out_specs=pl.BlockSpec((None, Cout, S), lambda n: (n, 0, 0)),
        compiler_params=pltpu.CompilerParams(
            dimension_semantics=("parallel",),       # N>=2 grid steps -> both v7x TensorCores
            vmem_limit_bytes=32 * 1024 * 1024),
        cost_estimate=pl.CostEstimate(flops=flops, transcendentals=0,
                                      bytes_accessed=bytes_accessed),
    )(x_lin, w2, wmask, scale, bias)

    out = out_flat.reshape(N, Cout, H, W)            # free metadata reshape -> NCHW directly

    if stride == 1:
        return out
    # TODO(synk): stride>1 path is exact but wasteful (computes the stride-1 output and
    # subsamples); a production downsampling BasicConv would use a strided-window kernel.
    Ho = (H + 2 * pad - K) // stride + 1
    Wo = (W + 2 * pad - K) // stride + 1
    return out[:, :, ::stride, ::stride][:, :, :Ho, :Wo]


def _reference(x_nchw, w_oihw, gamma, beta, running_mean, running_var,
               stride=1, eps=1e-5, neg_slope=0.1):
    """Plain-JAX reference matching PyTorch eval-mode semantics."""
    K = w_oihw.shape[-1]
    pad = K // 2
    y = lax.conv_general_dilated(
        x_nchw.astype(jnp.float32), w_oihw.astype(jnp.float32),
        window_strides=(stride, stride),
        padding=((pad, pad), (pad, pad)),
        dimension_numbers=("NCHW", "OIHW", "NCHW"))
    inv = gamma / jnp.sqrt(running_var + eps)
    y = y * inv[None, :, None, None] + (beta - running_mean * inv)[None, :, None, None]
    return jnp.where(y > 0, y, neg_slope * y)


if __name__ == "__main__":
    # BasicConv(in_channels=4, out_channels=8, kernel_size=3, stride=1)
    N, Cin, H, W = 2, 4, 16, 16
    Cout, K, stride = 8, 3, 1

    key = jax.random.PRNGKey(0)
    kx, kwt, kg, kb, km, kv = jax.random.split(key, 6)
    x = jax.random.normal(kx, (N, Cin, H, W), jnp.float32)
    conv_w = 0.1 * jax.random.normal(kwt, (Cout, Cin, K, K), jnp.float32)   # no bias
    gamma = jax.random.uniform(kg, (Cout,), jnp.float32, 0.5, 1.5)          # BN weight
    beta = 0.1 * jax.random.normal(kb, (Cout,), jnp.float32)                # BN bias
    running_mean = 0.1 * jax.random.normal(km, (Cout,), jnp.float32)
    running_var = jax.random.uniform(kv, (Cout,), jnp.float32, 0.5, 1.5)
    # TODO(synk): training-mode BatchNorm (batch statistics + running-stat updates) is not
    # modeled; this implements PyTorch eval-mode BN folded into a per-channel affine.

    out = basic_conv(x, conv_w, gamma, beta, running_mean, running_var, stride=stride)
    out = jax.block_until_ready(out)

    # Reference on the same bf16-rounded operands (the kernel feeds the MXU in bf16 and
    # accumulates in f32), so the comparison isolates kernel correctness.
    ref = _reference(x.astype(jnp.bfloat16).astype(jnp.float32),
                     conv_w.astype(jnp.bfloat16).astype(jnp.float32),
                     gamma, beta, running_mean, running_var, stride=stride)
    assert out.shape == (N, Cout, H, W), out.shape
    err = float(jnp.max(jnp.abs(out - ref)))
    assert jnp.allclose(out, ref, rtol=1e-4, atol=1e-4), err

    print("KERNEL_OK")
</pallas_src>

<mosaic_0001>
module attributes {stable_mosaic.version = 11 : i64} {
  func.func @_basic_conv_kernel(%arg0: i32, %arg1: memref<1x4x290xbf16, #tpu.memory_space<vmem>>, %arg2: memref<9x8x4xbf16, #tpu.memory_space<vmem>>, %arg3: memref<3x256xbf16, #tpu.memory_space<vmem>>, %arg4: memref<8x1xf32, #tpu.memory_space<vmem>>, %arg5: memref<8x1xf32, #tpu.memory_space<vmem>>, %arg6: memref<1x8x256xf32, #tpu.memory_space<vmem>>) attributes {dimension_semantics = [#tpu.dimension_semantics<parallel>], iteration_bounds = array<i64: 2>, scalar_prefetch = 0 : i64, scratch_operands = 0 : i64, tpu.core_type = #tpu.core_type<tc>, window_params = [{transform_indices = @transform_0, window_bounds = array<i64: 1, 4, 290>}, {pipeline_mode = #tpu.pipeline_mode<synchronous>, transform_indices = @transform_1, window_bounds = array<i64: 9, 8, 4>}, {pipeline_mode = #tpu.pipeline_mode<synchronous>, transform_indices = @transform_2, window_bounds = array<i64: 3, 256>}, {pipeline_mode = #tpu.pipeline_mode<synchronous>, transform_indices = @transform_3, window_bounds = array<i64: 8, 1>}, {pipeline_mode = #tpu.pipeline_mode<synchronous>, transform_indices = @transform_4, window_bounds = array<i64: 8, 1>}, {transform_indices = @transform_5, window_bounds = array<i64: 1, 8, 256>}]} {
    %cst = arith.constant 0.000000e+00 : f32
    %0 = vector.broadcast %cst : f32 to vector<8x256xf32>
    %c0 = arith.constant 0 : index
    %c0_0 = arith.constant 0 : index
    %c0_1 = arith.constant 0 : index
    %1 = vector.load %arg1[%c0, %c0_0, %c0_1] : memref<1x4x290xbf16, #tpu.memory_space<vmem>>, vector<1x4x256xbf16>
    %2 = vector.shape_cast %1 : vector<1x4x256xbf16> to vector<4x256xbf16>
    %c0_2 = arith.constant 0 : index
    %c0_3 = arith.constant 0 : index
    %3 = vector.load %arg3[%c0_2, %c0_3] : memref<3x256xbf16, #tpu.memory_space<vmem>>, vector<1x256xbf16>
    %4 = vector.broadcast %3 : vector<1x256xbf16> to vector<4x256xbf16>
    %5 = arith.mulf %2, %4 : vector<4x256xbf16>
    %c0_4 = arith.constant 0 : index
    %c0_5 = arith.constant 0 : index
    %c0_6 = arith.constant 0 : index
    %6 = vector.load %arg2[%c0_4, %c0_5, %c0_6] : memref<9x8x4xbf16, #tpu.memory_space<vmem>>, vector<1x8x4xbf16>
    %7 = vector.shape_cast %6 : vector<1x8x4xbf16> to vector<8x4xbf16>
    %cst_7 = arith.constant dense<0.000000e+00> : vector<8x256xf32>
    %8 = tpu.matmul %7, %5, %cst_7 {dimension_numbers = #tpu.dot_dimension_numbers<[1], [0], [0], [1], [0, 0, 1, 1], [], []>} : vector<8x4xbf16>, vector<4x256xbf16>, vector<8x256xf32> -> vector<8x256xf32>
    %9 = arith.addf %0, %8 : vector<8x256xf32>
    %c0_8 = arith.constant 0 : index
    %c0_9 = arith.constant 0 : index
    %c1 = arith.constant 1 : index
    %10 = vector.load %arg1[%c0_8, %c0_9, %c1] : memref<1x4x290xbf16, #tpu.memory_space<vmem>>, vector<1x4x256xbf16>
    %11 = vector.shape_cast %10 : vector<1x4x256xbf16> to vector<4x256xbf16>
    %c1_10 = arith.constant 1 : index
    %c0_11 = arith.constant 0 : index
    %c0_12 = arith.constant 0 : index
    %12 = vector.load %arg2[%c1_10, %c0_11, %c0_12] : memref<9x8x4xbf16, #tpu.memory_space<vmem>>, vector<1x8x4xbf16>
    %13 = vector.shape_cast %12 : vector<1x8x4xbf16> to vector<8x4xbf16>
    %cst_13 = arith.constant dense<0.000000e+00> : vector<8x256xf32>
    %14 = tpu.matmul %13, %11, %cst_13 {dimension_numbers = #tpu.dot_dimension_numbers<[1], [0], [0], [1], [0, 0, 1, 1], [], []>} : vector<8x4xbf16>, vector<4x256xbf16>, vector<8x256xf32> -> vector<8x256xf32>
    %15 = arith.addf %9, %14 : vector<8x256xf32>
    %c0_14 = arith.constant 0 : index
    %c0_15 = arith.constant 0 : index
    %c2 = arith.constant 2 : index
    %16 = vector.load %arg1[%c0_14, %c0_15, %c2] : memref<1x4x290xbf16, #tpu.memory_space<vmem>>, vector<1x4x256xbf16>
    %17 = vector.shape_cast %16 : vector<1x4x256xbf16> to vector<4x256xbf16>
    %c2_16 = arith.constant 2 : index
    %c0_17 = arith.constant 0 : index
    %18 = vector.load %arg3[%c2_16, %c0_17] : memref<3x256xbf16, #tpu.memory_space<vmem>>, vector<1x256xbf16>
    %19 = vector.broadcast %18 : vector<1x256xbf16> to vector<4x256xbf16>
    %20 = arith.mulf %17, %19 : vector<4x256xbf16>
    %c2_18 = arith.constant 2 : index
    %c0_19 = arith.constant 0 : index
    %c0_20 = arith.constant 0 : index
    %21 = vector.load %arg2[%c2_18, %c0_19, %c0_20] : memref<9x8x4xbf16, #tpu.memory_space<vmem>>, vector<1x8x4xbf16>
    %22 = vector.shape_cast %21 : vector<1x8x4xbf16> to vector<8x4xbf16>
    %cst_21 = arith.constant dense<0.000000e+00> : vector<8x256xf32>
    %23 = tpu.matmul %22, %20, %cst_21 {dimension_numbers = #tpu.dot_dimension_numbers<[1], [0], [0], [1], [0, 0, 1, 1], [], []>} : vector<8x4xbf16>, vector<4x256xbf16>, vector<8x256xf32> -> vector<8x256xf32>
    %24 = arith.addf %15, %23 : vector<8x256xf32>
    %c0_22 = arith.constant 0 : index
    %c0_23 = arith.constant 0 : index
    %c16 = arith.constant 16 : index
    %25 = vector.load %arg1[%c0_22, %c0_23, %c16] : memref<1x4x290xbf16, #tpu.memory_space<vmem>>, vector<1x4x256xbf16>
    %26 = vector.shape_cast %25 : vector<1x4x256xbf16> to vector<4x256xbf16>
    %c0_24 = arith.constant 0 : index
    %c0_25 = arith.constant 0 : index
    %27 = vector.load %arg3[%c0_24, %c0_25] : memref<3x256xbf16, #tpu.memory_space<vmem>>, vector<1x256xbf16>
    %28 = vector.broadcast %27 : vector<1x256xbf16> to vector<4x256xbf16>
    %29 = arith.mulf %26, %28 : vector<4x256xbf16>
    %c3 = arith.constant 3 : index
    %c0_26 = arith.constant 0 : index
    %c0_27 = arith.constant 0 : index
    %30 = vector.load %arg2[%c3, %c0_26, %c0_27] : memref<9x8x4xbf16, #tpu.memory_space<vmem>>, vector<1x8x4xbf16>
    %31 = vector.shape_cast %30 : vector<1x8x4xbf16> to vector<8x4xbf16>
    %cst_28 = arith.constant dense<0.000000e+00> : vector<8x256xf32>
    %32 = tpu.matmul %31, %29, %cst_28 {dimension_numbers = #tpu.dot_dimension_numbers<[1], [0], [0], [1], [0, 0, 1, 1], [], []>} : vector<8x4xbf16>, vector<4x256xbf16>, vector<8x256xf32> -> vector<8x256xf32>
    %33 = arith.addf %24, %32 : vector<8x256xf32>
    %c0_29 = arith.constant 0 : index
    %c0_30 = arith.constant 0 : index
    %c17 = arith.constant 17 : index
    %34 = vector.load %arg1[%c0_29, %c0_30, %c17] : memref<1x4x290xbf16, #tpu.memory_space<vmem>>, vector<1x4x256xbf16>
    %35 = vector.shape_cast %34 : vector<1x4x256xbf16> to vector<4x256xbf16>
    %c4 = arith.constant 4 : index
    %c0_31 = arith.constant 0 : index
    %c0_32 = arith.constant 0 : index
    %36 = vector.load %arg2[%c4, %c0_31, %c0_32] : memref<9x8x4xbf16, #tpu.memory_space<vmem>>, vector<1x8x4xbf16>
    %37 = vector.shape_cast %36 : vector<1x8x4xbf16> to vector<8x4xbf16>
    %cst_33 = arith.constant dense<0.000000e+00> : vector<8x256xf32>
    %38 = tpu.matmul %37, %35, %cst_33 {dimension_numbers = #tpu.dot_dimension_numbers<[1], [0], [0], [1], [0, 0, 1, 1], [], []>} : vector<8x4xbf16>, vector<4x256xbf16>, vector<8x256xf32> -> vector<8x256xf32>
    %39 = arith.addf %33, %38 : vector<8x256xf32>
    %c0_34 = arith.constant 0 : index
    %c0_35 = arith.constant 0 : index
    %c18 = arith.constant 18 : index
    %40 = vector.load %arg1[%c0_34, %c0_35, %c18] : memref<1x4x290xbf16, #tpu.memory_space<vmem>>, vector<1x4x256xbf16>
    %41 = vector.shape_cast %40 : vector<1x4x256xbf16> to vector<4x256xbf16>
    %c2_36 = arith.constant 2 : index
    %c0_37 = arith.constant 0 : index
    %42 = vector.load %arg3[%c2_36, %c0_37] : memref<3x256xbf16, #tpu.memory_space<vmem>>, vector<1x256xbf16>
    %43 = vector.broadcast %42 : vector<1x256xbf16> to vector<4x256xbf16>
    %44 = arith.mulf %41, %43 : vector<4x256xbf16>
    %c5 = arith.constant 5 : index
    %c0_38 = arith.constant 0 : index
    %c0_39 = arith.constant 0 : index
    %45 = vector.load %arg2[%c5, %c0_38, %c0_39] : memref<9x8x4xbf16, #tpu.memory_space<vmem>>, vector<1x8x4xbf16>
    %46 = vector.shape_cast %45 : vector<1x8x4xbf16> to vector<8x4xbf16>
    %cst_40 = arith.constant dense<0.000000e+00> : vector<8x256xf32>
    %47 = tpu.matmul %46, %44, %cst_40 {dimension_numbers = #tpu.dot_dimension_numbers<[1], [0], [0], [1], [0, 0, 1, 1], [], []>} : vector<8x4xbf16>, vector<4x256xbf16>, vector<8x256xf32> -> vector<8x256xf32>
    %48 = arith.addf %39, %47 : vector<8x256xf32>
    %c0_41 = arith.constant 0 : index
    %c0_42 = arith.constant 0 : index
    %c32 = arith.constant 32 : index
    %49 = vector.load %arg1[%c0_41, %c0_42, %c32] : memref<1x4x290xbf16, #tpu.memory_space<vmem>>, vector<1x4x256xbf16>
    %50 = vector.shape_cast %49 : vector<1x4x256xbf16> to vector<4x256xbf16>
    %c0_43 = arith.constant 0 : index
    %c0_44 = arith.constant 0 : index
    %51 = vector.load %arg3[%c0_43, %c0_44] : memref<3x256xbf16, #tpu.memory_space<vmem>>, vector<1x256xbf16>
    %52 = vector.broadcast %51 : vector<1x256xbf16> to vector<4x256xbf16>
    %53 = arith.mulf %50, %52 : vector<4x256xbf16>
    %c6 = arith.constant 6 : index
    %c0_45 = arith.constant 0 : index
    %c0_46 = arith.constant 0 : index
    %54 = vector.load %arg2[%c6, %c0_45, %c0_46] : memref<9x8x4xbf16, #tpu.memory_space<vmem>>, vector<1x8x4xbf16>
    %55 = vector.shape_cast %54 : vector<1x8x4xbf16> to vector<8x4xbf16>
    %cst_47 = arith.constant dense<0.000000e+00> : vector<8x256xf32>
    %56 = tpu.matmul %55, %53, %cst_47 {dimension_numbers = #tpu.dot_dimension_numbers<[1], [0], [0], [1], [0, 0, 1, 1], [], []>} : vector<8x4xbf16>, vector<4x256xbf16>, vector<8x256xf32> -> vector<8x256xf32>
    %57 = arith.addf %48, %56 : vector<8x256xf32>
    %c0_48 = arith.constant 0 : index
    %c0_49 = arith.constant 0 : index
    %c33 = arith.constant 33 : index
    %58 = vector.load %arg1[%c0_48, %c0_49, %c33] : memref<1x4x290xbf16, #tpu.memory_space<vmem>>, vector<1x4x256xbf16>
    %59 = vector.shape_cast %58 : vector<1x4x256xbf16> to vector<4x256xbf16>
    %c7 = arith.constant 7 : index
    %c0_50 = arith.constant 0 : index
    %c0_51 = arith.constant 0 : index
    %60 = vector.load %arg2[%c7, %c0_50, %c0_51] : memref<9x8x4xbf16, #tpu.memory_space<vmem>>, vector<1x8x4xbf16>
    %61 = vector.shape_cast %60 : vector<1x8x4xbf16> to vector<8x4xbf16>
    %cst_52 = arith.constant dense<0.000000e+00> : vector<8x256xf32>
    %62 = tpu.matmul %61, %59, %cst_52 {dimension_numbers = #tpu.dot_dimension_numbers<[1], [0], [0], [1], [0, 0, 1, 1], [], []>} : vector<8x4xbf16>, vector<4x256xbf16>, vector<8x256xf32> -> vector<8x256xf32>
    %63 = arith.addf %57, %62 : vector<8x256xf32>
    %c0_53 = arith.constant 0 : index
    %c0_54 = arith.constant 0 : index
    %c34 = arith.constant 34 : index
    %64 = vector.load %arg1[%c0_53, %c0_54, %c34] : memref<1x4x290xbf16, #tpu.memory_space<vmem>>, vector<1x4x256xbf16>
    %65 = vector.shape_cast %64 : vector<1x4x256xbf16> to vector<4x256xbf16>
    %c2_55 = arith.constant 2 : index
    %c0_56 = arith.constant 0 : index
    %66 = vector.load %arg3[%c2_55, %c0_56] : memref<3x256xbf16, #tpu.memory_space<vmem>>, vector<1x256xbf16>
    %67 = vector.broadcast %66 : vector<1x256xbf16> to vector<4x256xbf16>
    %68 = arith.mulf %65, %67 : vector<4x256xbf16>
    %c8 = arith.constant 8 : index
    %c0_57 = arith.constant 0 : index
    %c0_58 = arith.constant 0 : index
    %69 = vector.load %arg2[%c8, %c0_57, %c0_58] : memref<9x8x4xbf16, #tpu.memory_space<vmem>>, vector<1x8x4xbf16>
    %70 = vector.shape_cast %69 : vector<1x8x4xbf16> to vector<8x4xbf16>
    %cst_59 = arith.constant dense<0.000000e+00> : vector<8x256xf32>
    %71 = tpu.matmul %70, %68, %cst_59 {dimension_numbers = #tpu.dot_dimension_numbers<[1], [0], [0], [1], [0, 0, 1, 1], [], []>} : vector<8x4xbf16>, vector<4x256xbf16>, vector<8x256xf32> -> vector<8x256xf32>
    %72 = arith.addf %63, %71 : vector<8x256xf32>
    %c0_60 = arith.constant 0 : index
    %c0_61 = arith.constant 0 : index
    %73 = vector.load %arg4[%c0_60, %c0_61] : memref<8x1xf32, #tpu.memory_space<vmem>>, vector<8x1xf32>
    %74 = vector.broadcast %73 : vector<8x1xf32> to vector<8x256xf32>
    %75 = arith.mulf %72, %74 : vector<8x256xf32>
    %c0_62 = arith.constant 0 : index
    %c0_63 = arith.constant 0 : index
    %76 = vector.load %arg5[%c0_62, %c0_63] : memref<8x1xf32, #tpu.memory_space<vmem>>, vector<8x1xf32>
    %77 = vector.broadcast %76 : vector<8x1xf32> to vector<8x256xf32>
    %78 = arith.addf %75, %77 : vector<8x256xf32>
    %cst_64 = arith.constant 0.000000e+00 : f32
    %79 = vector.broadcast %cst_64 : f32 to vector<8x256xf32>
    %80 = arith.cmpf ogt, %78, %79 : vector<8x256xf32>
    %cst_65 = arith.constant 1.000000e-01 : f32
    %81 = vector.broadcast %cst_65 : f32 to vector<8x256xf32>
    %82 = arith.mulf %81, %78 : vector<8x256xf32>
    %83 = arith.select %80, %78, %82 : vector<8x256xi1>, vector<8x256xf32>
    %c0_66 = arith.constant 0 : index
    %c0_67 = arith.constant 0 : index
    %c0_68 = arith.constant 0 : index
    %84 = vector.load %arg6[%c0_66, %c0_67, %c0_68] : memref<1x8x256xf32, #tpu.memory_space<vmem>>, vector<1x8x256xf32>
    %85 = vector.shape_cast %84 : vector<1x8x256xf32> to vector<8x256xf32>
    %86 = vector.shape_cast %83 : vector<8x256xf32> to vector<1x8x256xf32>
    tpu.vector_store %arg6[%c0_66, %c0_67, %c0_68], %86 {strides = array<i32>} : memref<1x8x256xf32, #tpu.memory_space<vmem>>, vector<1x8x256xf32>,
    return
  }
  func.func @transform_0(%arg0: i32) -> (i32, i32, i32) {
    %c0_i32 = arith.constant 0 : i32
    %c0_i32_0 = arith.constant 0 : i32
    %c0_i32_1 = arith.constant 0 : i32
    return %arg0, %c0_i32, %c0_i32_0 : i32, i32, i32
  }
  func.func @transform_1(%arg0: i32) -> (i32, i32, i32) {
    %c0_i32 = arith.constant 0 : i32
    %c0_i32_0 = arith.constant 0 : i32
    %c0_i32_1 = arith.constant 0 : i32
    %c0_i32_2 = arith.constant 0 : i32
    return %c0_i32, %c0_i32_0, %c0_i32_1 : i32, i32, i32
  }
  func.func @transform_2(%arg0: i32) -> (i32, i32) {
    %c0_i32 = arith.constant 0 : i32
    %c0_i32_0 = arith.constant 0 : i32
    %c0_i32_1 = arith.constant 0 : i32
    return %c0_i32, %c0_i32_0 : i32, i32
  }
  func.func @transform_3(%arg0: i32) -> (i32, i32) {
    %c0_i32 = arith.constant 0 : i32
    %c0_i32_0 = arith.constant 0 : i32
    %c0_i32_1 = arith.constant 0 : i32
    return %c0_i32, %c0_i32_0 : i32, i32
  }
  func.func @transform_4(%arg0: i32) -> (i32, i32) {
    %c0_i32 = arith.constant 0 : i32
    %c0_i32_0 = arith.constant 0 : i32
    %c0_i32_1 = arith.constant 0 : i32
    return %c0_i32, %c0_i32_0 : i32, i32
  }
  func.func @transform_5(%arg0: i32) -> (i32, i32, i32) {
    %c0_i32 = arith.constant 0 : i32
    %c0_i32_0 = arith.constant 0 : i32
    %c0_i32_1 = arith.constant 0 : i32
    return %arg0, %c0_i32, %c0_i32_0 : i32, i32, i32
  }
}

</mosaic_0001>

<llo_original>
// kernel: tpu_custom_call.1
$region0: #{tpu_custom_call.1}
  #allocation0 [shape = 'u32[]', space=smem, size = 0x4, offset = 0x4, fixed_abs, tag = 'smem constant byte address 0x4 - core index']
  #allocation1 [shape = 'u32[144,128]{1,0:T(1,128)}', space=vmem, size = 0x12000, scoped, tag = 'internal scratch']
  %s0 = inlined_call_operand.vmem [shape: bf16[2,4,290], index: 0, kind: input, shape index: {}]
  %s1 = inlined_call_operand.vmem [shape: bf16[9,8,4], index: 1, kind: input, shape index: {}]
  %s2 = inlined_call_operand.vmem [shape: bf16[3,256], index: 2, kind: input, shape index: {}]
  %s3 = inlined_call_operand.vmem [shape: f32[8,1], index: 3, kind: input, shape index: {}]
  %s4 = inlined_call_operand.vmem [shape: f32[8,1], index: 4, kind: input, shape index: {}]
  %s5 = inlined_call_operand.hbm [shape: f32[2,8,256], index: 5, kind: output, shape index: {}]
  %s6 = sld [smem:[#allocation0]]
  $region53: #{tpu_custom_call.1} parent=0
    _
  %s8 = ssub.s32 1, %s6
  %s9 = scalar_select 0, %s8, %s6
  $region1: #{tpu_custom_call.1} parent=0
    #allocation2 [shape = 'u8[16384]{0}', space=vmem, size = 0x4000, scoped, tag = 'output window, operand 0']
    #allocation3 [shape = 's32[2]{0}', space=sflag, size = 0x8, scoped, tag = 'scoped memory for tpu_custom_call.1']
    %10 = vsyncpa [#allocation3], 0
    %s11 = scalar_lea.sflag [#allocation3], 1
    %12 = vsyncpa %s11, 0
    loop: start=0, step=1, limit=4
    $region2: #{tpu_custom_call.1} parent=1 // loop_pre_header
      _
    $region3: #{tpu_custom_call.1} parent=1 // loop_header
      %s14 = sphi 0, %s18
      %p15 = scmp.ge.s32.totalorder %s14, 4
      %s24 = sphi 0, %s26
      %s27 = sphi 0, %s24
      %s28 = sphi 0, %s27
      %s44 = sphi 0, %s28
      %s48 = sphi 0, %s48
      %s50 = sphi 0, %s48
      %s51 = sphi 0, %s50
      %s65 = sphi 0, %s51
      %s69 = sphi 0, %s69
      %s71 = sphi 0, %s69
      %s72 = sphi 0, %s71
      %s86 = sphi 0, %s72
      %s90 = sphi 0, %s90
      %s92 = sphi 0, %s90
      %s93 = sphi 0, %s92
      %s107 = sphi 0, %s93
      %s111 = sphi 0, %s111
      %s113 = sphi 0, %s111
      %s114 = sphi 0, %s113
      %s128 = sphi 0, %s114
      %s134 = sphi 0, %s136
      %s137 = sphi 0, %s134
      %s138 = sphi 0, %s137
      %s154 = sphi 0, %s138
    $region4: #{tpu_custom_call.1} parent=1 // loop_header_branch
      %17 = sbr.rel (%p15) target = $region8
    $region5: #{tpu_custom_call.1} parent=1 // loop_body
      %s19 = ssub.s32 %s14, 1
      %s20 = ssub.s32 %s14, 2
      %s21 = sadd.s32 %s14, 1
      %s22 = ssub.s32 %s14, %s21
      %p23 = scmp.eq.s32.totalorder %s22, 0
      %s25 = sadd.s32 %s24, 1
      %s26 = scalar_select %p23, %s24, %s25
      %p29 = pneg %p23
      %p30 = scmp.eq.s32.totalorder %s14, 1
      %p31 = por %p29, %p30
      %p32 = scmp.ne.s32.totalorder %s24, %s27
      %p33 = scmp.eq.s32.totalorder %s14, 0
      %p34 = por %p32, %p33
      %p35 = scmp.ne.s32.totalorder %s24, %s27
      %p36 = scmp.eq.s32.totalorder %s19, 1
      %p37 = por %p35, %p36
      %p38 = scmp.ne.s32.totalorder %s27, %s28
      %p39 = scmp.eq.s32.totalorder %s19, 0
      %p40 = por %p38, %p39
      %p41 = scmp.ne.s32.totalorder %s27, %s28
      %p42 = scmp.eq.s32.totalorder %s20, 1
      %p43 = por %p41, %p42
      %p45 = scmp.ne.s32.totalorder %s28, %s44
      %p46 = scmp.eq.s32.totalorder %s20, 0
      %p47 = por %p45, %p46
      %s49 = sadd.s32 %s48, 1
      %p52 = scmp.eq.s32.totalorder %s14, 1
      %p53 = scmp.ne.s32.totalorder %s48, %s50
      %p54 = scmp.eq.s32.totalorder %s14, 0
      %p55 = por %p53, %p54
      %p56 = scmp.ne.s32.totalorder %s48, %s50
      %p57 = scmp.eq.s32.totalorder %s19, 1
      %p58 = por %p56, %p57
      %p59 = scmp.ne.s32.totalorder %s50, %s51
      %p60 = scmp.eq.s32.totalorder %s19, 0
      %p61 = por %p59, %p60
      %p62 = scmp.ne.s32.totalorder %s50, %s51
      %p63 = scmp.eq.s32.totalorder %s20, 1
      %p64 = por %p62, %p63
      %p66 = scmp.ne.s32.totalorder %s51, %s65
      %p67 = scmp.eq.s32.totalorder %s20, 0
      %p68 = por %p66, %p67
      %s70 = sadd.s32 %s69, 1
      %p73 = scmp.eq.s32.totalorder %s14, 1
      %p74 = scmp.ne.s32.totalorder %s69, %s71
      %p75 = scmp.eq.s32.totalorder %s14, 0
      %p76 = por %p74, %p75
      %p77 = scmp.ne.s32.totalorder %s69, %s71
      %p78 = scmp.eq.s32.totalorder %s19, 1
      %p79 = por %p77, %p78
      %p80 = scmp.ne.s32.totalorder %s71, %s72
      %p81 = scmp.eq.s32.totalorder %s19, 0
      %p82 = por %p80, %p81
      %p83 = scmp.ne.s32.totalorder %s71, %s72
      %p84 = scmp.eq.s32.totalorder %s20, 1
      %p85 = por %p83, %p84
      %p87 = scmp.ne.s32.totalorder %s72, %s86
      %p88 = scmp.eq.s32.totalorder %s20, 0
      %p89 = por %p87, %p88
      %s91 = sadd.s32 %s90, 1
      %p94 = scmp.eq.s32.totalorder %s14, 1
      %p95 = scmp.ne.s32.totalorder %s90, %s92
      %p96 = scmp.eq.s32.totalorder %s14, 0
      %p97 = por %p95, %p96
      %p98 = scmp.ne.s32.totalorder %s90, %s92
      %p99 = scmp.eq.s32.totalorder %s19, 1
      %p100 = por %p98, %p99
      %p101 = scmp.ne.s32.totalorder %s92, %s93
      %p102 = scmp.eq.s32.totalorder %s19, 0
      %p103 = por %p101, %p102
      %p104 = scmp.ne.s32.totalorder %s92, %s93
      %p105 = scmp.eq.s32.totalorder %s20, 1
      %p106 = por %p104, %p105
      %p108 = scmp.ne.s32.totalorder %s93, %s107
      %p109 = scmp.eq.s32.totalorder %s20, 0
      %p110 = por %p108, %p109
      %s112 = sadd.s32 %s111, 1
      %p115 = scmp.eq.s32.totalorder %s14, 1
      %p116 = scmp.ne.s32.totalorder %s111, %s113
      %p117 = scmp.eq.s32.totalorder %s14, 0
      %p118 = por %p116, %p117
      %p119 = scmp.ne.s32.totalorder %s111, %s113
      %p120 = scmp.eq.s32.totalorder %s19, 1
      %p121 = por %p119, %p120
      %p122 = scmp.ne.s32.totalorder %s113, %s114
      %p123 = scmp.eq.s32.totalorder %s19, 0
      %p124 = por %p122, %p123
      %p125 = scmp.ne.s32.totalorder %s113, %s114
      %p126 = scmp.eq.s32.totalorder %s20, 1
      %p127 = por %p125, %p126
      %p129 = scmp.ne.s32.totalorder %s114, %s128
      %p130 = scmp.eq.s32.totalorder %s20, 0
      %p131 = por %p129, %p130
      %s132 = ssub.s32 %s14, %s21
      %p133 = scmp.eq.s32.totalorder %s132, 0
      %s135 = sadd.s32 %s134, 1
      %s136 = scalar_select %p133, %s134, %s135
      %p139 = pneg %p133
      %p140 = scmp.eq.s32.totalorder %s14, 1
      %p141 = por %p139, %p140
      %p142 = scmp.ne.s32.totalorder %s134, %s137
      %p143 = scmp.eq.s32.totalorder %s14, 0
      %p144 = por %p142, %p143
      %p145 = scmp.ne.s32.totalorder %s134, %s137
      %p146 = scmp.eq.s32.totalorder %s19, 1
      %p147 = por %p145, %p146
      %p148 = scmp.ne.s32.totalorder %s137, %s138
      %p149 = scmp.eq.s32.totalorder %s19, 0
      %p150 = por %p148, %p149
      %p151 = scmp.ne.s32.totalorder %s137, %s138
      %p152 = scmp.eq.s32.totalorder %s20, 1
      %p153 = por %p151, %p152
      %p155 = scmp.ne.s32.totalorder %s138, %s154
      %p156 = scmp.eq.s32.totalorder %s20, 0
      %p157 = por %p155, %p156
      %p158 = scmp.le.s32.totalorder 1, %s14
      %p159 = scmp.lt.s32.totalorder %s14, 3
      %p160 = pnand %p158, %p159
      %p161 = pneg %p160
      // Predicated region
      $region9: #{tpu_custom_call.1} parent=5 // pred_check
        _
      $region10: #{tpu_custom_call.1} parent=5 // pred_check_branch
        %163 = sbr.rel (%p160) target = $region12
      $region11: #{tpu_custom_call.1} parent=5 // pred_region
        %s164 = ssub.s32 %s14, 1
        // Predicated region
        $region13: #{tpu_custom_call.1} parent=11 // pred_check
          %p165 = pneg %p61
        $region14: #{tpu_custom_call.1} parent=11 // pred_check_branch
          %167 = sbr.rel (%p165) target = $region16
        $region15: #{tpu_custom_call.1} parent=11 // pred_region
          _
        $region16: #{tpu_custom_call.1} parent=11 // pred_fallthru
          _
        // Predicated region
        $region17: #{tpu_custom_call.1} parent=11 // pred_check
          %p168 = pneg %p82
        $region18: #{tpu_custom_call.1} parent=11 // pred_check_branch
          %170 = sbr.rel (%p168) target = $region20
        $region19: #{tpu_custom_call.1} parent=11 // pred_region
          _
        $region20: #{tpu_custom_call.1} parent=11 // pred_fallthru
          _
        // Predicated region
        $region21: #{tpu_custom_call.1} parent=11 // pred_check
          %p171 = pneg %p103
        $region22: #{tpu_custom_call.1} parent=11 // pred_check_branch
          %173 = sbr.rel (%p171) target = $region24
        $region23: #{tpu_custom_call.1} parent=11 // pred_region
          _
        $region24: #{tpu_custom_call.1} parent=11 // pred_fallthru
          _
        // Predicated region
        $region25: #{tpu_custom_call.1} parent=11 // pred_check
          %p174 = pneg %p124
        $region26: #{tpu_custom_call.1} parent=11 // pred_check_branch
          %176 = sbr.rel (%p174) target = $region28
        $region27: #{tpu_custom_call.1} parent=11 // pred_region
          _
        $region28: #{tpu_custom_call.1} parent=11 // pred_fallthru
          _
      $region12: #{tpu_custom_call.1} parent=5 // pred_fallthru
        _
      %p177 = scmp.lt.s32.totalorder %s14, 2
      // Predicated region
      $region29: #{tpu_custom_call.1} parent=5 // pred_check
        %p178 = pneg %p177
      $region30: #{tpu_custom_call.1} parent=5 // pred_check_branch
        %180 = sbr.rel (%p178) target = $region32
      $region31: #{tpu_custom_call.1} parent=5 // pred_region
        // Predicated region
        $region33: #{tpu_custom_call.1} parent=31 // pred_check
          %p181 = pneg %p34
        $region34: #{tpu_custom_call.1} parent=31 // pred_check_branch
          %183 = sbr.rel (%p181) target = $region36
        $region35: #{tpu_custom_call.1} parent=31 // pred_region
          %p184 = scmp.lt.s32.totalorder %s14, 1
          %s185 = scalar_select %p184, %s14, 1
          %s186 = smul.addr %s185, 3
          %s187 = smul.addr %s186, 2
          %s188 = scalar_lea.vmem %s0, %s187
        $region36: #{tpu_custom_call.1} parent=31 // pred_fallthru
          _
      $region32: #{tpu_custom_call.1} parent=5 // pred_fallthru
        _
      %p189 = scmp.le.s32.totalorder 1, %s14
      %p190 = scmp.lt.s32.totalorder %s14, 3
      %p191 = pnand %p189, %p190
      %p192 = pneg %p191
      // Predicated region
      $region37: #{tpu_custom_call.1} parent=5 // pred_check
        _
      $region38: #{tpu_custom_call.1} parent=5 // pred_check_branch
        %194 = sbr.rel (%p191) target = $region40
      $region39: #{tpu_custom_call.1} parent=5 // pred_region
        %s195 = ssub.s32 %s14, 1
        %p196 = scmp.lt.s32.totalorder %s19, 1
        %s197 = scalar_select %p196, %s19, 1
        %s198 = smul.addr %s197, 3
        %s199 = smul.addr %s198, 2
        %s200 = scalar_lea.vmem %s0, %s199
        %p201 = pneg %p40
        %p202 = pneg %p37
        %p203 = pneg %p61
        %p204 = pneg %p58
        %p205 = pneg %p82
        %p206 = pneg %p79
        %p207 = pneg %p103
        %p208 = pneg %p100
        %p209 = pneg %p124
        %p210 = pneg %p121
        %p211 = pneg %p150
        %p212 = pneg %p147
        %s213 = sand.u32 %s137, 1
        %s214 = scalar_lea.sflag [#allocation3], %s213
        %s215 = sand.u32 %s137, 1
        %s216 = smul.addr %s215, 16
        %s217 = scalar_lea.vmem [#allocation2], %s216
        %p218 = scmp.lt.s32.totalorder %s19, 1
        %s219 = scalar_select %p218, %s19, 1
        %s220 = smul.addr %s219, 3
        %s221 = smul.addr %s220, 2
        %s222 = scalar_lea.vmem %s0, %s221
        %v224 = vld [vmem:[%s222] sm:$0xf]
        %v225 = vld [vmem:[%s2] sm:$0x5]
        %v228 = vunpack.c.l.s4 1983009808
        %v229 = vunpack.c.0.s8 %v228
        %v230 = vlaneseq
        %v231 = vshrl.u32 %v230, 7
        %v232 = vsub.s32 %v229, %v231
        %v233 = vrot.slane %v225, %v232
        %v234 = vcombine.high %v233, %v233
        %v236 = vpack.i.b16 %v233, %v233
        %v238 = vlaneseq
        %v239 = vshrl.u32 %v238, 7
        %v240 = vsub.s32 0, %v239
        %v241 = vrot.slane %v236, %v240
        %v243 = vpack.i.b16 %v234, %v234
        %v245 = vlaneseq
        %v246 = vshrl.u32 %v245, 7
        %v247 = vsub.s32 0, %v246
        %v248 = vrot.slane %v243, %v247
        %v251 = vcombine.low %v241, %v248
        %v253 = vunpack.c.l.s4 1983009808
        %v254 = vunpack.c.0.s8 %v253
        %v255 = vlaneseq
        %v256 = vshrl.u32 %v255, 7
        %v257 = vsub.s32 %v254, %v256
        %v258 = vrot.slane %v251, %v257
        %v260 = vmul.bf16 %v224, %v258
        %v261 = vld [vmem:[%s1] sm:$0xf]
        %v262 = vld [vmem:[%s222] sm:$0x3f]
        %s263 = scalar_lea.vmem %s1, 4
        %v264 = vld [vmem:[%s263] sm:$0xf]
        %v266 = vcombine.high %v262, %v262
        %v268 = vunpack.c.l.s4 1983009808
        %v269 = vunpack.c.0.s8 %v268
        %v270 = vlaneseq
        %v271 = vshrl.u32 %v270, 7
        %v272 = vsub.s32 %v269, %v271
        %v273 = vrot.slane %v262, %v272
        %v275 = vunpack.c.l.s4 1983009808
        %v276 = vunpack.c.0.s8 %v275
        %v277 = vlaneseq
        %v278 = vshrl.u32 %v277, 7
        %v279 = vsub.s32 %v276, %v278
        %v280 = vrot.slane %v266, %v279
        %v281 = vcombine.high %v273, %v273
        %282 = vrot.lane.b32.xlu0 %v273, 127
        %v283 = vpop.permute.xlu0 %282
        %284 = vrot.lane.b32.xlu0 %v281, 127
        %v285 = vpop.permute.xlu0 %284
        %286 = vrot.lane.b32.xlu0 %v280, 127
        %v287 = vpop.permute.xlu0 %286
        %vm288 = vcmask 1039360
        %v289 = vsel %vm288, %v283, %v285
        %v290 = vsel %vm288, %v285, %v287
        %vm291 = vcmask 31744
        %v293 = vsel %vm291, %v264, 0
        %vm295 = vcmask 1041408
        %v297 = vsel %vm295, %v289, 0
        %v300 = vsel %vm295, %v290, 0
        %302 = vmatprep.subr.bf16.mxu0 %v300
        %303 = vmatpush1.bf16.msra.mxu0 %v297
        %304 = vmatprep.subr.bf16.mxu0 0
        %305 = vmatpush1.bf16.msra.mxu0 0
        %306 = vmatprep.subr.bf16.mxu0 0
        %307 = vmatpush1.bf16.msra.mxu0 0
        %308 = vmatprep.subr.bf16.mxu0 0
        %309 = vmatpush1.bf16.msra.mxu0 0
        %310 = vmatprep.subr.bf16.mxu0 0
        %311 = vmatpush1.bf16.msra.mxu0 0
        %312 = vmatprep.subr.bf16.mxu0 0
        %313 = vmatpush1.bf16.msra.mxu0 0
        %314 = vmatprep.subr.bf16.mxu0 0
        %315 = vmatpush1.bf16.msra.mxu0 0
        %316 = vmatprep.subr.bf16.mxu0 0
        %317 = vmatpush1.bf16.msra.mxu0 0
        %318 = vmatprep.subr.bf16.mxu0 0
        %319 = vmatpush1.bf16.msra.mxu0 0
        %320 = vmatprep.subr.bf16.mxu0 0
        %321 = vmatpush1.bf16.msra.mxu0 0
        %322 = vmatprep.subr.bf16.mxu0 0
        %323 = vmatpush1.bf16.msra.mxu0 0
        %324 = vmatprep.subr.bf16.mxu0 0
        %325 = vmatpush1.bf16.msra.mxu0 0
        %326 = vmatprep.subr.bf16.mxu0 0
        %327 = vmatpush1.bf16.msra.mxu0 0
        %328 = vmatprep.subr.bf16.mxu0 0
        %329 = vmatpush1.bf16.msra.mxu0 0
        %330 = vmatprep.subr.bf16.mxu0 0
        %331 = vmatpush1.bf16.msra.mxu0 0
        %332 = vmatprep.subr.bf16.mxu0 0
        %333 = vmatpush1.bf16.msra.mxu0 0
        %334 = vmatprep.mubr.bf16.mxu0 0
        %335 = vmatmul.mubr.bf16.gmra.mrb[0].mxu0 %v293
        %v336 = vpop.f32.mrb[0].mxu0
        %v337 = vadd.f32 0.0, %v336
        %v338 = vpop.f32.mrb[0].mxu0
        %v339 = vadd.f32 0.0, %v338
        %v340 = vpop.f32.mrb[0].mxu0
        %v341 = vpop.f32.mrb[0].mxu0
        %342 = vdwg.mxu0
        %v345 = vunpack.c.l.s4 1983009808
        %v346 = vunpack.c.0.s8 %v345
        %v347 = vlaneseq
        %v348 = vshrl.u32 %v347, 7
        %v349 = vsub.s32 %v346, %v348
        %v350 = vrot.slane %v260, %v349
        %v351 = vcombine.high %v350, %v350
        %v353 = vsel %vm291, %v261, 0
        %v356 = vsel %vm295, %v350, 0
        %v359 = vsel %vm295, %v351, 0
        %361 = vmatprep.subr.bf16.mxu0 %v359
        %362 = vmatpush1.bf16.msra.mxu0 %v356
        %363 = vmatprep.subr.bf16.mxu0 0
        %364 = vmatpush1.bf16.msra.mxu0 0
        %365 = vmatprep.subr.bf16.mxu0 0
        %366 = vmatpush1.bf16.msra.mxu0 0
        %367 = vmatprep.subr.bf16.mxu0 0
        %368 = vmatpush1.bf16.msra.mxu0 0
        %369 = vmatprep.subr.bf16.mxu0 0
        %370 = vmatpush1.bf16.msra.mxu0 0
        %371 = vmatprep.subr.bf16.mxu0 0
        %372 = vmatpush1.bf16.msra.mxu0 0
        %373 = vmatprep.subr.bf16.mxu0 0
        %374 = vmatpush1.bf16.msra.mxu0 0
        %375 = vmatprep.subr.bf16.mxu0 0
        %376 = vmatpush1.bf16.msra.mxu0 0
        %377 = vmatprep.subr.bf16.mxu0 0
        %378 = vmatpush1.bf16.msra.mxu0 0
        %379 = vmatprep.subr.bf16.mxu0 0
        %380 = vmatpush1.bf16.msra.mxu0 0
        %381 = vmatprep.subr.bf16.mxu0 0
        %382 = vmatpush1.bf16.msra.mxu0 0
        %383 = vmatprep.subr.bf16.mxu0 0
        %384 = vmatpush1.bf16.msra.mxu0 0
        %385 = vmatprep.subr.bf16.mxu0 0
        %386 = vmatpush1.bf16.msra.mxu0 0
        %387 = vmatprep.subr.bf16.mxu0 0
        %388 = vmatpush1.bf16.msra.mxu0 0
        %389 = vmatprep.subr.bf16.mxu0 0
        %390 = vmatpush1.bf16.msra.mxu0 0
        %391 = vmatprep.subr.bf16.mxu0 0
        %392 = vmatpush1.bf16.msra.mxu0 0
        %393 = vmatprep.mubr.bf16.mxu0 0
        %394 = vmatmul.mubr.bf16.gmra.mrb[0].mxu0 %v353
        %v395 = vpop.f32.mrb[0].mxu0
        %v396 = vadd.f32 %v337, %v395
        %v397 = vpop.f32.mrb[0].mxu0
        %v398 = vadd.f32 %v339, %v397
        %v399 = vpop.f32.mrb[0].mxu0
        %v400 = vpop.f32.mrb[0].mxu0
        %401 = vdwg.mxu0
        %v402 = vld [vmem:[%s222] sm:$0x3f]
        %v403 = vld [vmem:[%s2] sm:$0xa]
        %v406 = vunpack.c.l.s4 1983009808
        %v407 = vunpack.c.0.s8 %v406
        %v408 = vlaneseq
        %v409 = vshrl.u32 %v408, 7
        %v410 = vsub.s32 %v407, %v409
        %v411 = vrot.slane %v403, %v410
        %v412 = vcombine.high %v411, %v411
        %v414 = vpack.i.b16 %v411, %v411
        %v416 = vlaneseq
        %v417 = vshrl.u32 %v416, 7
        %v418 = vsub.s32 1, %v417
        %v419 = vrot.slane %v414, %v418
        %v421 = vpack.i.b16 %v412, %v412
        %v423 = vlaneseq
        %v424 = vshrl.u32 %v423, 7
        %v425 = vsub.s32 1, %v424
        %v426 = vrot.slane %v421, %v425
        %v429 = vcombine.low %v419, %v426
        %v431 = vunpack.c.l.s4 1983009808
        %v432 = vunpack.c.0.s8 %v431
        %v433 = vlaneseq
        %v434 = vshrl.u32 %v433, 7
        %v435 = vsub.s32 %v432, %v434
        %v436 = vrot.slane %v429, %v435
        %437 = vrot.lane.b32.xlu0 %v436, 2
        %v438 = vpop.permute.xlu0 %437
        %v439 = vrot.slane %v438, 6
        %vm440 = vcmask 15360
        %v441 = vsel %vm440, %v439, %v438
        %v443 = vmul.bf16 %v402, %v441
        %s444 = scalar_lea.vmem %s1, 8
        %v445 = vld [vmem:[%s444] sm:$0xf]
        %v447 = vcombine.high %v443, %v443
        %v449 = vunpack.c.l.s4 1983009808
        %v450 = vunpack.c.0.s8 %v449
        %v451 = vlaneseq
        %v452 = vshrl.u32 %v451, 7
        %v453 = vsub.s32 %v450, %v452
        %v454 = vrot.slane %v443, %v453
        %v456 = vunpack.c.l.s4 1983009808
        %v457 = vunpack.c.0.s8 %v456
        %v458 = vlaneseq
        %v459 = vshrl.u32 %v458, 7
        %v460 = vsub.s32 %v457, %v459
        %v461 = vrot.slane %v447, %v460
        %v462 = vcombine.high %v454, %v454
        %463 = vrot.lane.b32.xlu0 %v454, 126
        %v464 = vpop.permute.xlu0 %463
        %465 = vrot.lane.b32.xlu0 %v462, 126
        %v466 = vpop.permute.xlu0 %465
        %467 = vrot.lane.b32.xlu0 %v461, 126
        %v468 = vpop.permute.xlu0 %467
        %vm469 = vcmask 1031168
        %v470 = vsel %vm469, %v464, %v466
        %v471 = vsel %vm469, %v466, %v468
        %v473 = vsel %vm291, %v445, 0
        %v476 = vsel %vm295, %v470, 0
        %v479 = vsel %vm295, %v471, 0
        %481 = vmatprep.subr.bf16.mxu0 %v479
        %482 = vmatpush1.bf16.msra.mxu0 %v476
        %483 = vmatprep.subr.bf16.mxu0 0
        %484 = vmatpush1.bf16.msra.mxu0 0
        %485 = vmatprep.subr.bf16.mxu0 0
        %486 = vmatpush1.bf16.msra.mxu0 0
        %487 = vmatprep.subr.bf16.mxu0 0
        %488 = vmatpush1.bf16.msra.mxu0 0
        %489 = vmatprep.subr.bf16.mxu0 0
        %490 = vmatpush1.bf16.msra.mxu0 0
        %491 = vmatprep.subr.bf16.mxu0 0
        %492 = vmatpush1.bf16.msra.mxu0 0
        %493 = vmatprep.subr.bf16.mxu0 0
        %494 = vmatpush1.bf16.msra.mxu0 0
        %495 = vmatprep.subr.bf16.mxu0 0
        %496 = vmatpush1.bf16.msra.mxu0 0
        %497 = vmatprep.subr.bf16.mxu0 0
        %498 = vmatpush1.bf16.msra.mxu0 0
        %499 = vmatprep.subr.bf16.mxu0 0
        %500 = vmatpush1.bf16.msra.mxu0 0
        %501 = vmatprep.subr.bf16.mxu0 0
        %502 = vmatpush1.bf16.msra.mxu0 0
        %503 = vmatprep.subr.bf16.mxu0 0
        %504 = vmatpush1.bf16.msra.mxu0 0
        %505 = vmatprep.subr.bf16.mxu0 0
        %506 = vmatpush1.bf16.msra.mxu0 0
        %507 = vmatprep.subr.bf16.mxu0 0
        %508 = vmatpush1.bf16.msra.mxu0 0
        %509 = vmatprep.subr.bf16.mxu0 0
        %510 = vmatpush1.bf16.msra.mxu0 0
        %511 = vmatprep.subr.bf16.mxu0 0
        %512 = vmatpush1.bf16.msra.mxu0 0
        %513 = vmatprep.mubr.bf16.mxu0 0
        %514 = vmatmul.mubr.bf16.gmra.mrb[0].mxu0 %v473
        %v515 = vpop.f32.mrb[0].mxu0
        %v516 = vadd.f32 0.0, %v515
        %v517 = vpop.f32.mrb[0].mxu0
        %v518 = vadd.f32 0.0, %v517
        %v519 = vpop.f32.mrb[0].mxu0
        %v520 = vpop.f32.mrb[0].mxu0
        %521 = vdwg.mxu0
        %v522 = vadd.f32 %v396, %v516
        %v523 = vadd.f32 %v398, %v518
        %v524 = vld [vmem:[%s222] sm:$0x3f]
        %525 = vrot.lane.b32.xlu0 %v258, 16
        %v526 = vpop.permute.xlu0 %525
        %v527 = vrot.slane %v526, 6
        %vm528 = vcmask 130048
        %v529 = vsel %vm528, %v527, %v526
        %v531 = vmul.bf16 %v524, %v529
        %s532 = scalar_lea.vmem %s1, 12
        %v533 = vld [vmem:[%s532] sm:$0xf]
        %v535 = vcombine.high %v531, %v531
        %v537 = vunpack.c.l.s4 1983009808
        %v538 = vunpack.c.0.s8 %v537
        %v539 = vlaneseq
        %v540 = vshrl.u32 %v539, 7
        %v541 = vsub.s32 %v538, %v540
        %v542 = vrot.slane %v531, %v541
        %v544 = vunpack.c.l.s4 1983009808
        %v545 = vunpack.c.0.s8 %v544
        %v546 = vlaneseq
        %v547 = vshrl.u32 %v546, 7
        %v548 = vsub.s32 %v545, %v547
        %v549 = vrot.slane %v535, %v548
        %v550 = vcombine.high %v542, %v542
        %551 = vrot.lane.b32.xlu0 %v542, 112
        %v552 = vpop.permute.xlu0 %551
        %553 = vrot.lane.b32.xlu0 %v550, 112
        %v554 = vpop.permute.xlu0 %553
        %555 = vrot.lane.b32.xlu0 %v549, 112
        %v556 = vpop.permute.xlu0 %555
        %vm557 = vcmask 916480
        %v558 = vsel %vm557, %v552, %v554
        %v559 = vsel %vm557, %v554, %v556
        %v561 = vsel %vm291, %v533, 0
        %v564 = vsel %vm295, %v558, 0
        %v567 = vsel %vm295, %v559, 0
        %569 = vmatprep.subr.bf16.mxu0 %v567
        %570 = vmatpush1.bf16.msra.mxu0 %v564
        %571 = vmatprep.subr.bf16.mxu0 0
        %572 = vmatpush1.bf16.msra.mxu0 0
        %573 = vmatprep.subr.bf16.mxu0 0
        %574 = vmatpush1.bf16.msra.mxu0 0
        %575 = vmatprep.subr.bf16.mxu0 0
        %576 = vmatpush1.bf16.msra.mxu0 0
        %577 = vmatprep.subr.bf16.mxu0 0
        %578 = vmatpush1.bf16.msra.mxu0 0
        %579 = vmatprep.subr.bf16.mxu0 0
        %580 = vmatpush1.bf16.msra.mxu0 0
        %581 = vmatprep.subr.bf16.mxu0 0
        %582 = vmatpush1.bf16.msra.mxu0 0
        %583 = vmatprep.subr.bf16.mxu0 0
        %584 = vmatpush1.bf16.msra.mxu0 0
        %585 = vmatprep.subr.bf16.mxu0 0
        %586 = vmatpush1.bf16.msra.mxu0 0
        %587 = vmatprep.subr.bf16.mxu0 0
        %588 = vmatpush1.bf16.msra.mxu0 0
        %589 = vmatprep.subr.bf16.mxu0 0
        %590 = vmatpush1.bf16.msra.mxu0 0
        %591 = vmatprep.subr.bf16.mxu0 0
        %592 = vmatpush1.bf16.msra.mxu0 0
        %593 = vmatprep.subr.bf16.mxu0 0
        %594 = vmatpush1.bf16.msra.mxu0 0
        %595 = vmatprep.subr.bf16.mxu0 0
        %596 = vmatpush1.bf16.msra.mxu0 0
        %597 = vmatprep.subr.bf16.mxu0 0
        %598 = vmatpush1.bf16.msra.mxu0 0
        %599 = vmatprep.subr.bf16.mxu0 0
        %600 = vmatpush1.bf16.msra.mxu0 0
        %601 = vmatprep.mubr.bf16.mxu0 0
        %602 = vmatmul.mubr.bf16.gmra.mrb[0].mxu0 %v561
        %v603 = vpop.f32.mrb[0].mxu0
        %v604 = vadd.f32 0.0, %v603
        %v605 = vpop.f32.mrb[0].mxu0
        %v606 = vadd.f32 0.0, %v605
        %v607 = vpop.f32.mrb[0].mxu0
        %v608 = vpop.f32.mrb[0].mxu0
        %609 = vdwg.mxu0
        %v610 = vadd.f32 %v522, %v604
        %v611 = vadd.f32 %v523, %v606
        %v612 = vld [vmem:[%s222] sm:$0x3f]
        %s613 = scalar_lea.vmem %s1, 16
        %v614 = vld [vmem:[%s613] sm:$0xf]
        %v616 = vcombine.high %v612, %v612
        %v618 = vunpack.c.l.s4 1983009808
        %v619 = vunpack.c.0.s8 %v618
        %v620 = vlaneseq
        %v621 = vshrl.u32 %v620, 7
        %v622 = vsub.s32 %v619, %v621
        %v623 = vrot.slane %v612, %v622
        %v625 = vunpack.c.l.s4 1983009808
        %v626 = vunpack.c.0.s8 %v625
        %v627 = vlaneseq
        %v628 = vshrl.u32 %v627, 7
        %v629 = vsub.s32 %v626, %v628
        %v630 = vrot.slane %v616, %v629
        %v631 = vcombine.high %v623, %v623
        %632 = vrot.lane.b32.xlu0 %v623, 111
        %v633 = vpop.permute.xlu0 %632
        %634 = vrot.lane.b32.xlu0 %v631, 111
        %v635 = vpop.permute.xlu0 %634
        %636 = vrot.lane.b32.xlu0 %v630, 111
        %v637 = vpop.permute.xlu0 %636
        %vm638 = vcmask 908288
        %v639 = vsel %vm638, %v633, %v635
        %v640 = vsel %vm638, %v635, %v637
        %v642 = vsel %vm291, %v614, 0
        %v645 = vsel %vm295, %v639, 0
        %v648 = vsel %vm295, %v640, 0
        %650 = vmatprep.subr.bf16.mxu0 %v648
        %651 = vmatpush1.bf16.msra.mxu0 %v645
        %652 = vmatprep.subr.bf16.mxu0 0
        %653 = vmatpush1.bf16.msra.mxu0 0
        %654 = vmatprep.subr.bf16.mxu0 0
        %655 = vmatpush1.bf16.msra.mxu0 0
        %656 = vmatprep.subr.bf16.mxu0 0
        %657 = vmatpush1.bf16.msra.mxu0 0
        %658 = vmatprep.subr.bf16.mxu0 0
        %659 = vmatpush1.bf16.msra.mxu0 0
        %660 = vmatprep.subr.bf16.mxu0 0
        %661 = vmatpush1.bf16.msra.mxu0 0
        %662 = vmatprep.subr.bf16.mxu0 0
        %663 = vmatpush1.bf16.msra.mxu0 0
        %664 = vmatprep.subr.bf16.mxu0 0
        %665 = vmatpush1.bf16.msra.mxu0 0
        %666 = vmatprep.subr.bf16.mxu0 0
        %667 = vmatpush1.bf16.msra.mxu0 0
        %668 = vmatprep.subr.bf16.mxu0 0
        %669 = vmatpush1.bf16.msra.mxu0 0
        %670 = vmatprep.subr.bf16.mxu0 0
        %671 = vmatpush1.bf16.msra.mxu0 0
        %672 = vmatprep.subr.bf16.mxu0 0
        %673 = vmatpush1.bf16.msra.mxu0 0
        %674 = vmatprep.subr.bf16.mxu0 0
        %675 = vmatpush1.bf16.msra.mxu0 0
        %676 = vmatprep.subr.bf16.mxu0 0
        %677 = vmatpush1.bf16.msra.mxu0 0
        %678 = vmatprep.subr.bf16.mxu0 0
        %679 = vmatpush1.bf16.msra.mxu0 0
        %680 = vmatprep.subr.bf16.mxu0 0
        %681 = vmatpush1.bf16.msra.mxu0 0
        %682 = vmatprep.mubr.bf16.mxu0 0
        %683 = vmatmul.mubr.bf16.gmra.mrb[0].mxu0 %v642
        %v684 = vpop.f32.mrb[0].mxu0
        %v685 = vadd.f32 0.0, %v684
        %v686 = vpop.f32.mrb[0].mxu0
        %v687 = vadd.f32 0.0, %v686
        %v688 = vpop.f32.mrb[0].mxu0
        %v689 = vpop.f32.mrb[0].mxu0
        %690 = vdwg.mxu0
        %v691 = vadd.f32 %v610, %v685
        %v692 = vadd.f32 %v611, %v687
        %v693 = vld [vmem:[%s222] sm:$0x3f]
        %694 = vrot.lane.b32.xlu0 %v436, 18
        %v695 = vpop.permute.xlu0 %694
        %v696 = vrot.slane %v695, 6
        %vm697 = vcmask 146432
        %v698 = vsel %vm697, %v696, %v695
        %v700 = vmul.bf16 %v693, %v698
        %s701 = scalar_lea.vmem %s1, 20
        %v702 = vld [vmem:[%s701] sm:$0xf]
        %v704 = vcombine.high %v700, %v700
        %v706 = vunpack.c.l.s4 1983009808
        %v707 = vunpack.c.0.s8 %v706
        %v708 = vlaneseq
        %v709 = vshrl.u32 %v708, 7
        %v710 = vsub.s32 %v707, %v709
        %v711 = vrot.slane %v700, %v710
        %v713 = vunpack.c.l.s4 1983009808
        %v714 = vunpack.c.0.s8 %v713
        %v715 = vlaneseq
        %v716 = vshrl.u32 %v715, 7
        %v717 = vsub.s32 %v714, %v716
        %v718 = vrot.slane %v704, %v717
        %v719 = vcombine.high %v711, %v711
        %720 = vrot.lane.b32.xlu0 %v711, 110
        %v721 = vpop.permute.xlu0 %720
        %722 = vrot.lane.b32.xlu0 %v719, 110
        %v723 = vpop.permute.xlu0 %722
        %724 = vrot.lane.b32.xlu0 %v718, 110
        %v725 = vpop.permute.xlu0 %724
        %vm726 = vcmask 900096
        %v727 = vsel %vm726, %v721, %v723
        %v728 = vsel %vm726, %v723, %v725
        %v730 = vsel %vm291, %v702, 0
        %v733 = vsel %vm295, %v727, 0
        %v736 = vsel %vm295, %v728, 0
        %738 = vmatprep.subr.bf16.mxu0 %v736
        %739 = vmatpush1.bf16.msra.mxu0 %v733
        %740 = vmatprep.subr.bf16.mxu0 0
        %741 = vmatpush1.bf16.msra.mxu0 0
        %742 = vmatprep.subr.bf16.mxu0 0
        %743 = vmatpush1.bf16.msra.mxu0 0
        %744 = vmatprep.subr.bf16.mxu0 0
        %745 = vmatpush1.bf16.msra.mxu0 0
        %746 = vmatprep.subr.bf16.mxu0 0
        %747 = vmatpush1.bf16.msra.mxu0 0
        %748 = vmatprep.subr.bf16.mxu0 0
        %749 = vmatpush1.bf16.msra.mxu0 0
        %750 = vmatprep.subr.bf16.mxu0 0
        %751 = vmatpush1.bf16.msra.mxu0 0
        %752 = vmatprep.subr.bf16.mxu0 0
        %753 = vmatpush1.bf16.msra.mxu0 0
        %754 = vmatprep.subr.bf16.mxu0 0
        %755 = vmatpush1.bf16.msra.mxu0 0
        %756 = vmatprep.subr.bf16.mxu0 0
        %757 = vmatpush1.bf16.msra.mxu0 0
        %758 = vmatprep.subr.bf16.mxu0 0
        %759 = vmatpush1.bf16.msra.mxu0 0
        %760 = vmatprep.subr.bf16.mxu0 0
        %761 = vmatpush1.bf16.msra.mxu0 0
        %762 = vmatprep.subr.bf16.mxu0 0
        %763 = vmatpush1.bf16.msra.mxu0 0
        %764 = vmatprep.subr.bf16.mxu0 0
        %765 = vmatpush1.bf16.msra.mxu0 0
        %766 = vmatprep.subr.bf16.mxu0 0
        %767 = vmatpush1.bf16.msra.mxu0 0
        %768 = vmatprep.subr.bf16.mxu0 0
        %769 = vmatpush1.bf16.msra.mxu0 0
        %770 = vmatprep.mubr.bf16.mxu0 0
        %771 = vmatmul.mubr.bf16.gmra.mrb[0].mxu0 %v730
        %v772 = vpop.f32.mrb[0].mxu0
        %v773 = vadd.f32 0.0, %v772
        %v774 = vpop.f32.mrb[0].mxu0
        %v775 = vadd.f32 0.0, %v774
        %v776 = vpop.f32.mrb[0].mxu0
        %v777 = vpop.f32.mrb[0].mxu0
        %778 = vdwg.mxu0
        %v779 = vadd.f32 %v691, %v773
        %v780 = vadd.f32 %v692, %v775
        %v781 = vld [vmem:[%s222] sm:$0x3f]
        %782 = vrot.lane.b32.xlu0 %v258, 32
        %v783 = vpop.permute.xlu0 %782
        %v784 = vrot.slane %v783, 6
        %vm785 = vcmask 261120
        %v786 = vsel %vm785, %v784, %v783
        %v788 = vmul.bf16 %v781, %v786
        %s789 = scalar_lea.vmem %s1, 24
        %v790 = vld [vmem:[%s789] sm:$0xf]
        %v792 = vcombine.high %v788, %v788
        %v794 = vunpack.c.l.s4 1983009808
        %v795 = vunpack.c.0.s8 %v794
        %v796 = vlaneseq
        %v797 = vshrl.u32 %v796, 7
        %v798 = vsub.s32 %v795, %v797
        %v799 = vrot.slane %v788, %v798
        %v801 = vunpack.c.l.s4 1983009808
        %v802 = vunpack.c.0.s8 %v801
        %v803 = vlaneseq
        %v804 = vshrl.u32 %v803, 7
        %v805 = vsub.s32 %v802, %v804
        %v806 = vrot.slane %v792, %v805
        %v807 = vcombine.high %v799, %v799
        %808 = vrot.lane.b32.xlu0 %v799, 96
        %v809 = vpop.permute.xlu0 %808
        %810 = vrot.lane.b32.xlu0 %v807, 96
        %v811 = vpop.permute.xlu0 %810
        %812 = vrot.lane.b32.xlu0 %v806, 96
        %v813 = vpop.permute.xlu0 %812
        %vm814 = vcmask 785408
        %v815 = vsel %vm814, %v809, %v811
        %v816 = vsel %vm814, %v811, %v813
        %v818 = vsel %vm291, %v790, 0
        %v821 = vsel %vm295, %v815, 0
        %v824 = vsel %vm295, %v816, 0
        %826 = vmatprep.subr.bf16.mxu0 %v824
        %827 = vmatpush1.bf16.msra.mxu0 %v821
        %828 = vmatprep.subr.bf16.mxu0 0
        %829 = vmatpush1.bf16.msra.mxu0 0
        %830 = vmatprep.subr.bf16.mxu0 0
        %831 = vmatpush1.bf16.msra.mxu0 0
        %832 = vmatprep.subr.bf16.mxu0 0
        %833 = vmatpush1.bf16.msra.mxu0 0
        %834 = vmatprep.subr.bf16.mxu0 0
        %835 = vmatpush1.bf16.msra.mxu0 0
        %836 = vmatprep.subr.bf16.mxu0 0
        %837 = vmatpush1.bf16.msra.mxu0 0
        %838 = vmatprep.subr.bf16.mxu0 0
        %839 = vmatpush1.bf16.msra.mxu0 0
        %840 = vmatprep.subr.bf16.mxu0 0
        %841 = vmatpush1.bf16.msra.mxu0 0
        %842 = vmatprep.subr.bf16.mxu0 0
        %843 = vmatpush1.bf16.msra.mxu0 0
        %844 = vmatprep.subr.bf16.mxu0 0
        %845 = vmatpush1.bf16.msra.mxu0 0
        %846 = vmatprep.subr.bf16.mxu0 0
        %847 = vmatpush1.bf16.msra.mxu0 0
        %848 = vmatprep.subr.bf16.mxu0 0
        %849 = vmatpush1.bf16.msra.mxu0 0
        %850 = vmatprep.subr.bf16.mxu0 0
        %851 = vmatpush1.bf16.msra.mxu0 0
        %852 = vmatprep.subr.bf16.mxu0 0
        %853 = vmatpush1.bf16.msra.mxu0 0
        %854 = vmatprep.subr.bf16.mxu0 0
        %855 = vmatpush1.bf16.msra.mxu0 0
        %856 = vmatprep.subr.bf16.mxu0 0
        %857 = vmatpush1.bf16.msra.mxu0 0
        %858 = vmatprep.mubr.bf16.mxu0 0
        %859 = vmatmul.mubr.bf16.gmra.mrb[0].mxu0 %v818
        %v860 = vpop.f32.mrb[0].mxu0
        %v861 = vadd.f32 0.0, %v860
        %v862 = vpop.f32.mrb[0].mxu0
        %v863 = vadd.f32 0.0, %v862
        %v864 = vpop.f32.mrb[0].mxu0
        %v865 = vpop.f32.mrb[0].mxu0
        %866 = vdwg.mxu0
        %v867 = vadd.f32 %v779, %v861
        %v868 = vadd.f32 %v780, %v863
        %v869 = vld [vmem:[%s222] sm:$0x3f]
        %s870 = scalar_lea.vmem %s1, 28
        %v871 = vld [vmem:[%s870] sm:$0xf]
        %v873 = vcombine.high %v869, %v869
        %v875 = vunpack.c.l.s4 1983009808
        %v876 = vunpack.c.0.s8 %v875
        %v877 = vlaneseq
        %v878 = vshrl.u32 %v877, 7
        %v879 = vsub.s32 %v876, %v878
        %v880 = vrot.slane %v869, %v879
        %v882 = vunpack.c.l.s4 1983009808
        %v883 = vunpack.c.0.s8 %v882
        %v884 = vlaneseq
        %v885 = vshrl.u32 %v884, 7
        %v886 = vsub.s32 %v883, %v885
        %v887 = vrot.slane %v873, %v886
        %v888 = vcombine.high %v880, %v880
        %889 = vrot.lane.b32.xlu0 %v880, 95
        %v890 = vpop.permute.xlu0 %889
        %891 = vrot.lane.b32.xlu0 %v888, 95
        %v892 = vpop.permute.xlu0 %891
        %893 = vrot.lane.b32.xlu0 %v887, 95
        %v894 = vpop.permute.xlu0 %893
        %vm895 = vcmask 777216
        %v896 = vsel %vm895, %v890, %v892
        %v897 = vsel %vm895, %v892, %v894
        %v899 = vsel %vm291, %v871, 0
        %v902 = vsel %vm295, %v896, 0
        %v905 = vsel %vm295, %v897, 0
        %907 = vmatprep.subr.bf16.mxu0 %v905
        %908 = vmatpush1.bf16.msra.mxu0 %v902
        %909 = vmatprep.subr.bf16.mxu0 0
        %910 = vmatpush1.bf16.msra.mxu0 0
        %911 = vmatprep.subr.bf16.mxu0 0
        %912 = vmatpush1.bf16.msra.mxu0 0
        %913 = vmatprep.subr.bf16.mxu0 0
        %914 = vmatpush1.bf16.msra.mxu0 0
        %915 = vmatprep.subr.bf16.mxu0 0
        %916 = vmatpush1.bf16.msra.mxu0 0
        %917 = vmatprep.subr.bf16.mxu0 0
        %918 = vmatpush1.bf16.msra.mxu0 0
        %919 = vmatprep.subr.bf16.mxu0 0
        %920 = vmatpush1.bf16.msra.mxu0 0
        %921 = vmatprep.subr.bf16.mxu0 0
        %922 = vmatpush1.bf16.msra.mxu0 0
        %923 = vmatprep.subr.bf16.mxu0 0
        %924 = vmatpush1.bf16.msra.mxu0 0
        %925 = vmatprep.subr.bf16.mxu0 0
        %926 = vmatpush1.bf16.msra.mxu0 0
        %927 = vmatprep.subr.bf16.mxu0 0
        %928 = vmatpush1.bf16.msra.mxu0 0
        %929 = vmatprep.subr.bf16.mxu0 0
        %930 = vmatpush1.bf16.msra.mxu0 0
        %931 = vmatprep.subr.bf16.mxu0 0
        %932 = vmatpush1.bf16.msra.mxu0 0
        %933 = vmatprep.subr.bf16.mxu0 0
        %934 = vmatpush1.bf16.msra.mxu0 0
        %935 = vmatprep.subr.bf16.mxu0 0
        %936 = vmatpush1.bf16.msra.mxu0 0
        %937 = vmatprep.subr.bf16.mxu0 0
        %938 = vmatpush1.bf16.msra.mxu0 0
        %939 = vmatprep.mubr.bf16.mxu0 0
        %940 = vmatmul.mubr.bf16.gmra.mrb[0].mxu0 %v899
        %v941 = vpop.f32.mrb[0].mxu0
        %v942 = vadd.f32 0.0, %v941
        %v943 = vpop.f32.mrb[0].mxu0
        %v944 = vadd.f32 0.0, %v943
        %v945 = vpop.f32.mrb[0].mxu0
        %v946 = vpop.f32.mrb[0].mxu0
        %947 = vdwg.mxu0
        %v948 = vadd.f32 %v867, %v942
        %v949 = vadd.f32 %v868, %v944
        %v950 = vld [vmem:[%s222] sm:$0x3f]
        %951 = vrot.lane.b32.xlu0 %v436, 34
        %v952 = vpop.permute.xlu0 %951
        %v953 = vrot.slane %v952, 6
        %vm954 = vcmask 277504
        %v955 = vsel %vm954, %v953, %v952
        %v957 = vmul.bf16 %v950, %v955
        %s958 = scalar_lea.vmem %s1, 32
        %v959 = vld [vmem:[%s958] sm:$0xf]
        %v961 = vcombine.high %v957, %v957
        %v963 = vunpack.c.l.s4 1983009808
        %v964 = vunpack.c.0.s8 %v963
        %v965 = vlaneseq
        %v966 = vshrl.u32 %v965, 7
        %v967 = vsub.s32 %v964, %v966
        %v968 = vrot.slane %v957, %v967
        %v970 = vunpack.c.l.s4 1983009808
        %v971 = vunpack.c.0.s8 %v970
        %v972 = vlaneseq
        %v973 = vshrl.u32 %v972, 7
        %v974 = vsub.s32 %v971, %v973
        %v975 = vrot.slane %v961, %v974
        %v976 = vcombine.high %v968, %v968
        %977 = vrot.lane.b32.xlu0 %v968, 94
        %v978 = vpop.permute.xlu0 %977
        %979 = vrot.lane.b32.xlu0 %v976, 94
        %v980 = vpop.permute.xlu0 %979
        %981 = vrot.lane.b32.xlu0 %v975, 94
        %v982 = vpop.permute.xlu0 %981
        %vm983 = vcmask 769024
        %v984 = vsel %vm983, %v978, %v980
        %v985 = vsel %vm983, %v980, %v982
        %v987 = vsel %vm291, %v959, 0
        %v990 = vsel %vm295, %v984, 0
        %v993 = vsel %vm295, %v985, 0
        %995 = vmatprep.subr.bf16.mxu0 %v993
        %996 = vmatpush1.bf16.msra.mxu0 %v990
        %997 = vmatprep.subr.bf16.mxu0 0
        %998 = vmatpush1.bf16.msra.mxu0 0
        %999 = vmatprep.subr.bf16.mxu0 0
        %1000 = vmatpush1.bf16.msra.mxu0 0
        %1001 = vmatprep.subr.bf16.mxu0 0
        %1002 = vmatpush1.bf16.msra.mxu0 0
        %1003 = vmatprep.subr.bf16.mxu0 0
        %1004 = vmatpush1.bf16.msra.mxu0 0
        %1005 = vmatprep.subr.bf16.mxu0 0
        %1006 = vmatpush1.bf16.msra.mxu0 0
        %1007 = vmatprep.subr.bf16.mxu0 0
        %1008 = vmatpush1.bf16.msra.mxu0 0
        %1009 = vmatprep.subr.bf16.mxu0 0
        %1010 = vmatpush1.bf16.msra.mxu0 0
        %1011 = vmatprep.subr.bf16.mxu0 0
        %1012 = vmatpush1.bf16.msra.mxu0 0
        %1013 = vmatprep.subr.bf16.mxu0 0
        %1014 = vmatpush1.bf16.msra.mxu0 0
        %1015 = vmatprep.subr.bf16.mxu0 0
        %1016 = vmatpush1.bf16.msra.mxu0 0
        %1017 = vmatprep.subr.bf16.mxu0 0
        %1018 = vmatpush1.bf16.msra.mxu0 0
        %1019 = vmatprep.subr.bf16.mxu0 0
        %1020 = vmatpush1.bf16.msra.mxu0 0
        %1021 = vmatprep.subr.bf16.mxu0 0
        %1022 = vmatpush1.bf16.msra.mxu0 0
        %1023 = vmatprep.subr.bf16.mxu0 0
        %1024 = vmatpush1.bf16.msra.mxu0 0
        %1025 = vmatprep.subr.bf16.mxu0 0
        %1026 = vmatpush1.bf16.msra.mxu0 0
        %1027 = vmatprep.mubr.bf16.mxu0 0
        %1028 = vmatmul.mubr.bf16.gmra.mrb[0].mxu0 %v987
        %v1029 = vpop.f32.mrb[0].mxu0
        %v1030 = vadd.f32 0.0, %v1029
        %v1031 = vpop.f32.mrb[0].mxu0
        %v1032 = vadd.f32 0.0, %v1031
        %v1033 = vpop.f32.mrb[0].mxu0
        %v1034 = vpop.f32.mrb[0].mxu0
        %1035 = vdwg.mxu0
        %v1036 = vadd.f32 %v948, %v1030
        %v1037 = vadd.f32 %v949, %v1032
        %v1038 = vld [vmem:[%s3] sm:$0xff]
        %1040 = vset.pattern.permute.xlu0 0
        %1041 = vperm.xlu0 %1040, %v1038
        %v1042 = vpop.permute.xlu0 %1041
        %v1044 = vmul.f32 %v1036, %v1042
        %v1045 = vmul.f32 %v1037, %v1042
        %v1046 = vld [vmem:[%s4] sm:$0xff]
        %1048 = vset.pattern.permute.xlu0 0
        %1049 = vperm.xlu0 %1048, %v1046
        %v1050 = vpop.permute.xlu0 %1049
        %v1052 = vadd.f32 %v1044, %v1050
        %v1053 = vadd.f32 %v1045, %v1050
        %vm1054 = vcmp.gt.f32.partialorder %v1052, 0.0
        %vm1055 = vcmp.gt.f32.partialorder %v1053, 0.0
        %v1056 = vmul.f32 %v1052, 0.1
        %v1057 = vmul.f32 %v1053, 0.1
        %v1058 = vsel %vm1054, %v1052, %v1056
        %v1059 = vsel %vm1055, %v1053, %v1057
        %1060 = vst [vmem:[%s217] sm:$0xff] %v1058
        %1061 = vst [vmem:[%s217 + $0x8] sm:$0xff] %v1059
        %s1062 = sand.u32 %s137, 1
        %s1063 = scalar_lea.sflag [#allocation3], %s1062
        %s1064 = sand.u32 %s137, 1
        %s1065 = smul.addr %s1064, 16
        %s1066 = scalar_lea.vmem [#allocation2], %s1065
        // Predicated region
        $region41: #{tpu_custom_call.1} parent=39 // pred_check
          %p1067 = pneg %p147
        $region42: #{tpu_custom_call.1} parent=39 // pred_check_branch
          %1069 = sbr.rel (%p1067) target = $region44
        $region43: #{tpu_custom_call.1} parent=39 // pred_region
          %s1071 = ssub.s32 256, 256
          %1072 = vsyncadd %s1063, %s1071
          %s1073 = smul.addr %s19, 2
          %s1074 = smul.addr %s1073, 128
          %s1075 = scalar_lea.hbm %s5, %s1074
          %s1077 = sshll.u32 %s1066, 4
          %s1078 = int_to_ptr.vmem [resolvable:$true] %s1077
          %1080 = dma.vmem_to_hbm [thread:$0]  %s1078, 256, %s1075, %s1063
        $region44: #{tpu_custom_call.1} parent=39 // pred_fallthru
          _
      $region40: #{tpu_custom_call.1} parent=5 // pred_fallthru
        _
      %p1081 = scmp.le.s32.totalorder 2, %s14
      // Predicated region
      $region45: #{tpu_custom_call.1} parent=5 // pred_check
        %p1082 = pneg %p1081
      $region46: #{tpu_custom_call.1} parent=5 // pred_check_branch
        %1084 = sbr.rel (%p1082) target = $region48
      $region47: #{tpu_custom_call.1} parent=5 // pred_region
        %s1085 = ssub.s32 %s14, 2
        // Predicated region
        $region49: #{tpu_custom_call.1} parent=47 // pred_check
          %p1086 = pneg %p153
        $region50: #{tpu_custom_call.1} parent=47 // pred_check_branch
          %1088 = sbr.rel (%p1086) target = $region52
        $region51: #{tpu_custom_call.1} parent=47 // pred_region
          %s1089 = sand.u32 %s138, 1
          %s1090 = scalar_lea.sflag [#allocation3], %s1089
          %s1091 = sand.u32 %s138, 1
          %s1092 = smul.addr %s1091, 16
          %s1093 = scalar_lea.vmem [#allocation2], %s1092
          %1094 = dma.done %s1090, 256
        $region52: #{tpu_custom_call.1} parent=47 // pred_fallthru
          _
      $region48: #{tpu_custom_call.1} parent=5 // pred_fallthru
        _
    $region6: #{tpu_custom_call.1} parent=1 // loop_footer
      %s18 = sadd.s32 1, %s14
    $region7: #{tpu_custom_call.1} parent=1 // loop_footer_branch
      %13 = sbr.rel target = $region3
    $region8: #{tpu_custom_call.1} parent=1 // loop_exit
      _
    %1095 = vsyncpa [#allocation3], 1
    %s1096 = scalar_lea.sflag [#allocation3], 1
    %1097 = vsyncpa %s1096, 1

</llo_original>
